<compile_context>
chip_gen: v6e
topology: v6e:2x2x1
jax: 0.10.0
libtpu: 0.0.40
codegen_flags: <defaults>
</compile_context>

<pallas_src>
import jax
import jax.numpy as jnp
from jax.experimental import pallas as pl
from jax.experimental.pallas import tpu as pltpu

BN_EPS = 1e-5
LANE = 128          # 128-lane padding: matches v5e MXU exactly, fine on v6e/v7x
_NEG_LOGIT = -1e9   # bias on padded logit lanes -> exp underflows to 0 in f32


def _round_up(n, m):
    return ((n + m - 1) // m) * m


def _pad_axis(a, axis, new_size, value=0.0):
    pad = new_size - a.shape[axis]
    if pad == 0:
        return a
    widths = [(0, 0)] * a.ndim
    widths[axis] = (0, pad)
    return jnp.pad(a, widths, constant_values=value)


# --------------------------------------------------------------------------
# Kernel: one grid point == one independent forward pass (own BN statistics).
# --------------------------------------------------------------------------
def _net_kernel(x_ref,
                w1_ref, g1_ref, be1_ref,
                w2_ref, g2_ref, be2_ref,
                w3_ref, b3_ref,
                out_ref):
    x = x_ref[0]                  # (B, d_in_p), bf16 MXU operand
    mxu_dtype = x.dtype

    def bn_relu(h, gamma, beta):
        # Training-mode BatchNorm1d over the batch axis (biased variance),
        # centered activation computed once and reused.  f32 VPU math.
        # NOTE: for very large per-step B, replace these axis-0 reductions
        # with an MXU ones-row reduction (ones(1,B) @ h); irrelevant at B=8.
        mean = jnp.mean(h, axis=0, keepdims=True)
        hc = h - mean
        var = jnp.mean(hc * hc, axis=0, keepdims=True)
        h = hc * (jax.lax.rsqrt(var + BN_EPS) * gamma) + beta
        return jnp.maximum(h, 0.0)

    # ---- fc1 (bias cancelled by training-mode BN) + BN1 + ReLU ----
    h = jnp.dot(x, w1_ref[...], preferred_element_type=jnp.float32)
    h = bn_relu(h, g1_ref[...], be1_ref[...])

    # ---- fc2 (bias cancelled by training-mode BN) + BN2 + ReLU ----
    h = jnp.dot(h.astype(mxu_dtype), w2_ref[...],
                preferred_element_type=jnp.float32)
    h = bn_relu(h, g2_ref[...], be2_ref[...])

    # ---- fc3 + LogSoftmax(dim=1) ----
    logits = jnp.dot(h.astype(mxu_dtype), w3_ref[...],
                     preferred_element_type=jnp.float32) + b3_ref[...]
    m = jnp.max(logits, axis=1, keepdims=True)
    lse = m + jnp.log(jnp.sum(jnp.exp(logits - m), axis=1, keepdims=True))
    out_ref[0] = (logits - lse).astype(out_ref.dtype)


# --------------------------------------------------------------------------
# One-time parameter preparation (hoisted out of the per-call path).
# --------------------------------------------------------------------------
def prepare_params(params, *, mxu_dtype=jnp.bfloat16):
    """Pad + cast the parameters once; returns kernel-ready device arrays.

    params['b1'] / params['b2'] are intentionally unused — they are
    mathematically cancelled by the batch-stat BatchNorm that follows.
    """
    d_in, d_hid = params["w1"].shape
    d_out = params["w3"].shape[1]
    d_in_p = _round_up(d_in, LANE)
    d_hid_p = _round_up(d_hid, LANE)
    d_out_p = _round_up(d_out, LANE)

    prepped = {
        # MXU operands -> bf16, zero-padded (padded rows/cols contribute 0).
        "w1": _pad_axis(_pad_axis(params["w1"], 0, d_in_p), 1, d_hid_p).astype(mxu_dtype),
        "w2": _pad_axis(_pad_axis(params["w2"], 0, d_hid_p), 1, d_hid_p).astype(mxu_dtype),
        "w3": _pad_axis(_pad_axis(params["w3"], 0, d_hid_p), 1, d_out_p).astype(mxu_dtype),
        # BN affine params stay f32 (VPU path).  Padded lanes: gamma=1, beta=0.
        "g1": _pad_axis(params["g1"].astype(jnp.float32), 1, d_hid_p, 1.0),
        "be1": _pad_axis(params["be1"].astype(jnp.float32), 1, d_hid_p, 0.0),
        "g2": _pad_axis(params["g2"].astype(jnp.float32), 1, d_hid_p, 1.0),
        "be2": _pad_axis(params["be2"].astype(jnp.float32), 1, d_hid_p, 0.0),
        # Padded logit lanes get a huge negative bias -> exact log-softmax.
        "b3": _pad_axis(params["b3"].astype(jnp.float32), 1, d_out_p, _NEG_LOGIT),
    }
    # Materialize once so no padding/cast work remains on the per-call path.
    prepped = {k: jax.block_until_ready(v) for k, v in prepped.items()}
    prepped["dims"] = (d_in, d_hid, d_out, d_in_p, d_hid_p, d_out_p)
    prepped["mxu_dtype"] = mxu_dtype
    return prepped


# --------------------------------------------------------------------------
# Forward: x is (N, B, d_in) for N independent forwards, or (B, d_in).
# --------------------------------------------------------------------------
def net_forward(x, prepped):
    d_in, d_hid, d_out, d_in_p, d_hid_p, d_out_p = prepped["dims"]
    mxu_dtype = prepped["mxu_dtype"]

    squeeze = False
    if x.ndim == 2:
        x = x[None]
        squeeze = True
    N, B, _ = x.shape
    assert B % 8 == 0, "batch must be a sublane multiple (pad + mask BN stats otherwise)"

    # Only the activations are padded/cast per call.
    xp = _pad_axis(x, 2, d_in_p).astype(mxu_dtype)

    w1, g1, be1 = prepped["w1"], prepped["g1"], prepped["be1"]
    w2, g2, be2 = prepped["w2"], prepped["g2"], prepped["be2"]
    w3, b3 = prepped["w3"], prepped["b3"]

    # Instance grid: x/out move per grid point; weights stay VMEM-resident
    # (constant index_map => no re-DMA across the grid).
    in_specs = [
        pl.BlockSpec((1, B, d_in_p), lambda i: (i, 0, 0)),
        pl.BlockSpec((d_in_p, d_hid_p), lambda i: (0, 0)),
        pl.BlockSpec((1, d_hid_p), lambda i: (0, 0)),
        pl.BlockSpec((1, d_hid_p), lambda i: (0, 0)),
        pl.BlockSpec((d_hid_p, d_hid_p), lambda i: (0, 0)),
        pl.BlockSpec((1, d_hid_p), lambda i: (0, 0)),
        pl.BlockSpec((1, d_hid_p), lambda i: (0, 0)),
        pl.BlockSpec((d_hid_p, d_out_p), lambda i: (0, 0)),
        pl.BlockSpec((1, d_out_p), lambda i: (0, 0)),
    ]
    out_spec = pl.BlockSpec((1, B, d_out_p), lambda i: (i, 0, 0))

    # Advisory cost estimate so XLA schedules this tiny custom call sensibly.
    flops = int(2 * N * B * (d_in_p * d_hid_p + d_hid_p * d_hid_p + d_hid_p * d_out_p))
    transcendentals = int(N * (B * d_out_p + B + 2 * d_hid_p))  # exp, log, rsqrt
    bytes_accessed = int(
        N * B * d_in_p * 2
        + (d_in_p * d_hid_p + d_hid_p * d_hid_p + d_hid_p * d_out_p) * 2
        + (4 * d_hid_p + d_out_p) * 4
        + N * B * d_out_p * 4
    )

    out_padded = pl.pallas_call(
        _net_kernel,
        out_shape=jax.ShapeDtypeStruct((N, B, d_out_p), jnp.float32),
        grid=(N,),
        in_specs=in_specs,
        out_specs=out_spec,
        compiler_params=pltpu.CompilerParams(
            dimension_semantics=("parallel",)),   # v7x: split instances over 2 TCs
        cost_estimate=pl.CostEstimate(
            flops=flops,
            transcendentals=transcendentals,
            bytes_accessed=bytes_accessed),
    )(xp, w1, g1, be1, w2, g2, be2, w3, b3)

    out = out_padded[:, :, :d_out]
    return out[0] if squeeze else out


# --------------------------------------------------------------------------
# Pure-JAX mirror (same bf16-MXU / f32-VPU split) for correctness checks.
# --------------------------------------------------------------------------
def net_reference(x, params, *, mxu_dtype=jnp.bfloat16):
    def bn_relu(h, gamma, beta):
        mean = jnp.mean(h, axis=0, keepdims=True)
        hc = h - mean
        var = jnp.mean(hc * hc, axis=0, keepdims=True)
        h = hc * jax.lax.rsqrt(var + BN_EPS) * gamma + beta
        return jnp.maximum(h, 0.0)

    w1 = params["w1"].astype(mxu_dtype)
    w2 = params["w2"].astype(mxu_dtype)
    w3 = params["w3"].astype(mxu_dtype)
    h = jnp.dot(x.astype(mxu_dtype), w1, preferred_element_type=jnp.float32)
    h = bn_relu(h, params["g1"], params["be1"])
    h = jnp.dot(h.astype(mxu_dtype), w2, preferred_element_type=jnp.float32)
    h = bn_relu(h, params["g2"], params["be2"])
    logits = jnp.dot(h.astype(mxu_dtype), w3,
                     preferred_element_type=jnp.float32) + params["b3"]
    return jax.nn.log_softmax(logits, axis=1)


def init_params(key, d_in, d_hid, d_out):
    """Deterministic init mimicking torch.nn.Linear default U(-1/sqrt(fan_in), ...)."""
    ks = jax.random.split(key, 6)

    def lin(kw, kb, fan_in, fan_out):
        bound = 1.0 / jnp.sqrt(fan_in)
        w = jax.random.uniform(kw, (fan_in, fan_out), jnp.float32, -bound, bound)
        b = jax.random.uniform(kb, (1, fan_out), jnp.float32, -bound, bound)
        return w, b

    w1, b1 = lin(ks[0], ks[1], d_in, d_hid)
    w2, b2 = lin(ks[2], ks[3], d_hid, d_hid)
    w3, b3 = lin(ks[4], ks[5], d_hid, d_out)
    return {
        # b1/b2 kept for torch parity; unused by the kernel (cancelled by BN).
        "w1": w1, "b1": b1,
        "g1": jnp.ones((1, d_hid), jnp.float32), "be1": jnp.zeros((1, d_hid), jnp.float32),
        "w2": w2, "b2": b2,
        "g2": jnp.ones((1, d_hid), jnp.float32), "be2": jnp.zeros((1, d_hid), jnp.float32),
        "w3": w3, "b3": b3,
    }


if __name__ == "__main__":
    # Small shapes consistent with the module: 4 independent forwards,
    # each batch=8, d_in=32, d_hid=64, d_out=10.
    N_INST, B, D_IN, D_HID, D_OUT = 4, 8, 32, 64, 10

    key = jax.random.PRNGKey(0)
    kx, kp = jax.random.split(key)
    x = jax.random.normal(kx, (N_INST, B, D_IN), jnp.float32)
    params = init_params(kp, D_IN, D_HID, D_OUT)

    prepped = prepare_params(params)          # one-time parameter prep
    out = net_forward(x, prepped)
    out = jax.block_until_ready(out)

    assert out.shape == (N_INST, B, D_OUT)
    # Sanity: log-softmax rows sum to 1 in prob space.
    assert bool(jnp.allclose(jnp.sum(jnp.exp(out), axis=-1), 1.0, atol=1e-3))
    # Correctness vs. a pure-JAX per-instance mirror of the same computation.
    ref = jax.vmap(lambda xi: net_reference(xi, params))(x)
    assert bool(jnp.allclose(out, ref, atol=5e-2)), "kernel mismatch vs reference"

    # Single-instance (2-D input) path also works.
    out1 = jax.block_until_ready(net_forward(x[0], prepped))
    assert out1.shape == (B, D_OUT)
    assert bool(jnp.allclose(out1, ref[0], atol=5e-2))

    print("KERNEL_OK")
</pallas_src>

<mosaic_0001>
module attributes {stable_mosaic.version = 11 : i64} {
  func.func @_net_kernel(%arg0: i32, %arg1: memref<1x8x128xbf16, #tpu.memory_space<vmem>>, %arg2: memref<128x128xbf16, #tpu.memory_space<vmem>>, %arg3: memref<1x128xf32, #tpu.memory_space<vmem>>, %arg4: memref<1x128xf32, #tpu.memory_space<vmem>>, %arg5: memref<128x128xbf16, #tpu.memory_space<vmem>>, %arg6: memref<1x128xf32, #tpu.memory_space<vmem>>, %arg7: memref<1x128xf32, #tpu.memory_space<vmem>>, %arg8: memref<128x128xbf16, #tpu.memory_space<vmem>>, %arg9: memref<1x128xf32, #tpu.memory_space<vmem>>, %arg10: memref<1x8x128xf32, #tpu.memory_space<vmem>>) attributes {dimension_semantics = [#tpu.dimension_semantics<parallel>], iteration_bounds = array<i64: 4>, scalar_prefetch = 0 : i64, scratch_operands = 0 : i64, tpu.core_type = #tpu.core_type<tc>, window_params = [{transform_indices = @transform_0, window_bounds = array<i64: 1, 8, 128>}, {pipeline_mode = #tpu.pipeline_mode<synchronous>, transform_indices = @transform_1, window_bounds = array<i64: 128, 128>}, {pipeline_mode = #tpu.pipeline_mode<synchronous>, transform_indices = @transform_2, window_bounds = array<i64: 1, 128>}, {pipeline_mode = #tpu.pipeline_mode<synchronous>, transform_indices = @transform_3, window_bounds = array<i64: 1, 128>}, {pipeline_mode = #tpu.pipeline_mode<synchronous>, transform_indices = @transform_4, window_bounds = array<i64: 128, 128>}, {pipeline_mode = #tpu.pipeline_mode<synchronous>, transform_indices = @transform_5, window_bounds = array<i64: 1, 128>}, {pipeline_mode = #tpu.pipeline_mode<synchronous>, transform_indices = @transform_6, window_bounds = array<i64: 1, 128>}, {pipeline_mode = #tpu.pipeline_mode<synchronous>, transform_indices = @transform_7, window_bounds = array<i64: 128, 128>}, {pipeline_mode = #tpu.pipeline_mode<synchronous>, transform_indices = @transform_8, window_bounds = array<i64: 1, 128>}, {transform_indices = @transform_9, window_bounds = array<i64: 1, 8, 128>}]} {
    %c0 = arith.constant 0 : index
    %c0_0 = arith.constant 0 : index
    %c0_1 = arith.constant 0 : index
    %0 = vector.load %arg1[%c0, %c0_0, %c0_1] : memref<1x8x128xbf16, #tpu.memory_space<vmem>>, vector<1x8x128xbf16>
    %1 = vector.shape_cast %0 : vector<1x8x128xbf16> to vector<8x128xbf16>
    %c0_2 = arith.constant 0 : index
    %c0_3 = arith.constant 0 : index
    %2 = vector.load %arg2[%c0_2, %c0_3] : memref<128x128xbf16, #tpu.memory_space<vmem>>, vector<128x128xbf16>
    %cst = arith.constant dense<0.000000e+00> : vector<8x128xf32>
    %3 = tpu.matmul %1, %2, %cst {dimension_numbers = #tpu.dot_dimension_numbers<[1], [0], [0], [1], [0, 0, 1, 1], [], []>} : vector<8x128xbf16>, vector<128x128xbf16>, vector<8x128xf32> -> vector<8x128xf32>
    %c0_4 = arith.constant 0 : index
    %c0_5 = arith.constant 0 : index
    %4 = vector.load %arg3[%c0_4, %c0_5] : memref<1x128xf32, #tpu.memory_space<vmem>>, vector<1x128xf32>
    %c0_6 = arith.constant 0 : index
    %c0_7 = arith.constant 0 : index
    %5 = vector.load %arg4[%c0_6, %c0_7] : memref<1x128xf32, #tpu.memory_space<vmem>>, vector<1x128xf32>
    %cst_8 = arith.constant dense<0.000000e+00> : vector<128xf32>
    %6 = vector.multi_reduction <add>, %3, %cst_8 [0] : vector<8x128xf32> to vector<128xf32>
    %7 = vector.shape_cast %6 : vector<128xf32> to vector<1x128xf32>
    %cst_9 = arith.constant 8.000000e+00 : f32
    %8 = vector.broadcast %cst_9 : f32 to vector<1x128xf32>
    %9 = arith.divf %7, %8 : vector<1x128xf32>
    %10 = vector.broadcast %9 : vector<1x128xf32> to vector<8x128xf32>
    %11 = arith.subf %3, %10 : vector<8x128xf32>
    %12 = arith.mulf %11, %11 : vector<8x128xf32>
    %cst_10 = arith.constant dense<0.000000e+00> : vector<128xf32>
    %13 = vector.multi_reduction <add>, %12, %cst_10 [0] : vector<8x128xf32> to vector<128xf32>
    %14 = vector.shape_cast %13 : vector<128xf32> to vector<1x128xf32>
    %cst_11 = arith.constant 8.000000e+00 : f32
    %15 = vector.broadcast %cst_11 : f32 to vector<1x128xf32>
    %16 = arith.divf %14, %15 : vector<1x128xf32>
    %cst_12 = arith.constant 9.99999974E-6 : f32
    %17 = vector.broadcast %cst_12 : f32 to vector<1x128xf32>
    %18 = arith.addf %16, %17 : vector<1x128xf32>
    %19 = math.rsqrt %18 : vector<1x128xf32>
    %20 = arith.mulf %19, %4 : vector<1x128xf32>
    %21 = vector.broadcast %20 : vector<1x128xf32> to vector<8x128xf32>
    %22 = arith.mulf %11, %21 : vector<8x128xf32>
    %23 = vector.broadcast %5 : vector<1x128xf32> to vector<8x128xf32>
    %24 = arith.addf %22, %23 : vector<8x128xf32>
    %cst_13 = arith.constant 0.000000e+00 : f32
    %25 = vector.broadcast %cst_13 : f32 to vector<8x128xf32>
    %26 = arith.maximumf %24, %25 : vector<8x128xf32>
    %27 = arith.truncf %26 : vector<8x128xf32> to vector<8x128xbf16>
    %c0_14 = arith.constant 0 : index
    %c0_15 = arith.constant 0 : index
    %28 = vector.load %arg5[%c0_14, %c0_15] : memref<128x128xbf16, #tpu.memory_space<vmem>>, vector<128x128xbf16>
    %cst_16 = arith.constant dense<0.000000e+00> : vector<8x128xf32>
    %29 = tpu.matmul %27, %28, %cst_16 {dimension_numbers = #tpu.dot_dimension_numbers<[1], [0], [0], [1], [0, 0, 1, 1], [], []>} : vector<8x128xbf16>, vector<128x128xbf16>, vector<8x128xf32> -> vector<8x128xf32>
    %c0_17 = arith.constant 0 : index
    %c0_18 = arith.constant 0 : index
    %30 = vector.load %arg6[%c0_17, %c0_18] : memref<1x128xf32, #tpu.memory_space<vmem>>, vector<1x128xf32>
    %c0_19 = arith.constant 0 : index
    %c0_20 = arith.constant 0 : index
    %31 = vector.load %arg7[%c0_19, %c0_20] : memref<1x128xf32, #tpu.memory_space<vmem>>, vector<1x128xf32>
    %cst_21 = arith.constant dense<0.000000e+00> : vector<128xf32>
    %32 = vector.multi_reduction <add>, %29, %cst_21 [0] : vector<8x128xf32> to vector<128xf32>
    %33 = vector.shape_cast %32 : vector<128xf32> to vector<1x128xf32>
    %cst_22 = arith.constant 8.000000e+00 : f32
    %34 = vector.broadcast %cst_22 : f32 to vector<1x128xf32>
    %35 = arith.divf %33, %34 : vector<1x128xf32>
    %36 = vector.broadcast %35 : vector<1x128xf32> to vector<8x128xf32>
    %37 = arith.subf %29, %36 : vector<8x128xf32>
    %38 = arith.mulf %37, %37 : vector<8x128xf32>
    %cst_23 = arith.constant dense<0.000000e+00> : vector<128xf32>
    %39 = vector.multi_reduction <add>, %38, %cst_23 [0] : vector<8x128xf32> to vector<128xf32>
    %40 = vector.shape_cast %39 : vector<128xf32> to vector<1x128xf32>
    %cst_24 = arith.constant 8.000000e+00 : f32
    %41 = vector.broadcast %cst_24 : f32 to vector<1x128xf32>
    %42 = arith.divf %40, %41 : vector<1x128xf32>
    %cst_25 = arith.constant 9.99999974E-6 : f32
    %43 = vector.broadcast %cst_25 : f32 to vector<1x128xf32>
    %44 = arith.addf %42, %43 : vector<1x128xf32>
    %45 = math.rsqrt %44 : vector<1x128xf32>
    %46 = arith.mulf %45, %30 : vector<1x128xf32>
    %47 = vector.broadcast %46 : vector<1x128xf32> to vector<8x128xf32>
    %48 = arith.mulf %37, %47 : vector<8x128xf32>
    %49 = vector.broadcast %31 : vector<1x128xf32> to vector<8x128xf32>
    %50 = arith.addf %48, %49 : vector<8x128xf32>
    %cst_26 = arith.constant 0.000000e+00 : f32
    %51 = vector.broadcast %cst_26 : f32 to vector<8x128xf32>
    %52 = arith.maximumf %50, %51 : vector<8x128xf32>
    %53 = arith.truncf %52 : vector<8x128xf32> to vector<8x128xbf16>
    %c0_27 = arith.constant 0 : index
    %c0_28 = arith.constant 0 : index
    %54 = vector.load %arg8[%c0_27, %c0_28] : memref<128x128xbf16, #tpu.memory_space<vmem>>, vector<128x128xbf16>
    %cst_29 = arith.constant dense<0.000000e+00> : vector<8x128xf32>
    %55 = tpu.matmul %53, %54, %cst_29 {dimension_numbers = #tpu.dot_dimension_numbers<[1], [0], [0], [1], [0, 0, 1, 1], [], []>} : vector<8x128xbf16>, vector<128x128xbf16>, vector<8x128xf32> -> vector<8x128xf32>
    %c0_30 = arith.constant 0 : index
    %c0_31 = arith.constant 0 : index
    %56 = vector.load %arg9[%c0_30, %c0_31] : memref<1x128xf32, #tpu.memory_space<vmem>>, vector<1x128xf32>
    %57 = vector.broadcast %56 : vector<1x128xf32> to vector<8x128xf32>
    %58 = arith.addf %55, %57 : vector<8x128xf32>
    %cst_32 = arith.constant dense<0xFF800000> : vector<8xf32>
    %59 = vector.multi_reduction <maximumf>, %58, %cst_32 [1] : vector<8x128xf32> to vector<8xf32>
    %60 = vector.shape_cast %59 : vector<8xf32> to vector<8x1xf32>
    %61 = vector.broadcast %60 : vector<8x1xf32> to vector<8x128xf32>
    %62 = arith.subf %58, %61 : vector<8x128xf32>
    %63 = math.exp %62 : vector<8x128xf32>
    %cst_33 = arith.constant dense<0.000000e+00> : vector<8xf32>
    %64 = vector.multi_reduction <add>, %63, %cst_33 [1] : vector<8x128xf32> to vector<8xf32>
    %65 = vector.shape_cast %64 : vector<8xf32> to vector<8x1xf32>
    %66 = math.log %65 : vector<8x1xf32>
    %67 = arith.addf %60, %66 : vector<8x1xf32>
    %68 = vector.broadcast %67 : vector<8x1xf32> to vector<8x128xf32>
    %69 = arith.subf %58, %68 : vector<8x128xf32>
    %c0_34 = arith.constant 0 : index
    %c0_35 = arith.constant 0 : index
    %c0_36 = arith.constant 0 : index
    %70 = vector.load %arg10[%c0_34, %c0_35, %c0_36] : memref<1x8x128xf32, #tpu.memory_space<vmem>>, vector<1x8x128xf32>
    %71 = vector.shape_cast %70 : vector<1x8x128xf32> to vector<8x128xf32>
    %72 = vector.shape_cast %69 : vector<8x128xf32> to vector<1x8x128xf32>
    tpu.vector_store %arg10[%c0_34, %c0_35, %c0_36], %72 {strides = array<i32>} : memref<1x8x128xf32, #tpu.memory_space<vmem>>, vector<1x8x128xf32>,
    return
  }
  func.func @transform_0(%arg0: i32) -> (i32, i32, i32) {
    %c0_i32 = arith.constant 0 : i32
    %c0_i32_0 = arith.constant 0 : i32
    %c0_i32_1 = arith.constant 0 : i32
    return %arg0, %c0_i32, %c0_i32_0 : i32, i32, i32
  }
  func.func @transform_1(%arg0: i32) -> (i32, i32) {
    %c0_i32 = arith.constant 0 : i32
    %c0_i32_0 = arith.constant 0 : i32
    %c0_i32_1 = arith.constant 0 : i32
    return %c0_i32, %c0_i32_0 : i32, i32
  }
  func.func @transform_2(%arg0: i32) -> (i32, i32) {
    %c0_i32 = arith.constant 0 : i32
    %c0_i32_0 = arith.constant 0 : i32
    %c0_i32_1 = arith.constant 0 : i32
    return %c0_i32, %c0_i32_0 : i32, i32
  }
  func.func @transform_3(%arg0: i32) -> (i32, i32) {
    %c0_i32 = arith.constant 0 : i32
    %c0_i32_0 = arith.constant 0 : i32
    %c0_i32_1 = arith.constant 0 : i32
    return %c0_i32, %c0_i32_0 : i32, i32
  }
  func.func @transform_4(%arg0: i32) -> (i32, i32) {
    %c0_i32 = arith.constant 0 : i32
    %c0_i32_0 = arith.constant 0 : i32
    %c0_i32_1 = arith.constant 0 : i32
    return %c0_i32, %c0_i32_0 : i32, i32
  }
  func.func @transform_5(%arg0: i32) -> (i32, i32) {
    %c0_i32 = arith.constant 0 : i32
    %c0_i32_0 = arith.constant 0 : i32
    %c0_i32_1 = arith.constant 0 : i32
    return %c0_i32, %c0_i32_0 : i32, i32
  }
  func.func @transform_6(%arg0: i32) -> (i32, i32) {
    %c0_i32 = arith.constant 0 : i32
    %c0_i32_0 = arith.constant 0 : i32
    %c0_i32_1 = arith.constant 0 : i32
    return %c0_i32, %c0_i32_0 : i32, i32
  }
  func.func @transform_7(%arg0: i32) -> (i32, i32) {
    %c0_i32 = arith.constant 0 : i32
    %c0_i32_0 = arith.constant 0 : i32
    %c0_i32_1 = arith.constant 0 : i32
    return %c0_i32, %c0_i32_0 : i32, i32
  }
  func.func @transform_8(%arg0: i32) -> (i32, i32) {
    %c0_i32 = arith.constant 0 : i32
    %c0_i32_0 = arith.constant 0 : i32
    %c0_i32_1 = arith.constant 0 : i32
    return %c0_i32, %c0_i32_0 : i32, i32
  }
  func.func @transform_9(%arg0: i32) -> (i32, i32, i32) {
    %c0_i32 = arith.constant 0 : i32
    %c0_i32_0 = arith.constant 0 : i32
    %c0_i32_1 = arith.constant 0 : i32
    return %arg0, %c0_i32, %c0_i32_0 : i32, i32, i32
  }
}

</mosaic_0001>

<llo_original>
// kernel: tpu_custom_call.1
$region0: #{tpu_custom_call.1}
  #allocation0 [shape = 'u32[]', space=smem, size = 0x4, offset = 0x4, fixed_abs, tag = 'smem constant byte address 0x4 - core index']
  #allocation1 [shape = 'u32[144,128]{1,0:T(1,128)}', space=vmem, size = 0x12000, scoped, tag = 'internal scratch']
  %s0 = inlined_call_operand.hbm [shape: bf16[4,8,128], index: 0, kind: input, shape index: {}]
  %s1 = inlined_call_operand.hbm [shape: bf16[128,128], index: 1, kind: input, shape index: {}]
  %s2 = inlined_call_operand.vmem [shape: f32[1,128], index: 2, kind: input, shape index: {}]
  %s3 = inlined_call_operand.vmem [shape: f32[1,128], index: 3, kind: input, shape index: {}]
  %s4 = inlined_call_operand.hbm [shape: bf16[128,128], index: 4, kind: input, shape index: {}]
  %s5 = inlined_call_operand.vmem [shape: f32[1,128], index: 5, kind: input, shape index: {}]
  %s6 = inlined_call_operand.vmem [shape: f32[1,128], index: 6, kind: input, shape index: {}]
  %s7 = inlined_call_operand.hbm [shape: bf16[128,128], index: 7, kind: input, shape index: {}]
  %s8 = inlined_call_operand.vmem [shape: f32[1,128], index: 8, kind: input, shape index: {}]
  %s9 = inlined_call_operand.hbm [shape: f32[4,8,128], index: 9, kind: output, shape index: {}]
  %s10 = sld [smem:[#allocation0]]
  $region85: #{tpu_custom_call.1} parent=0
    _
  %s12 = ssub.s32 1, %s10
  %s13 = scalar_select 0, %s12, %s10
  $region1: #{tpu_custom_call.1} parent=0
    #allocation2 [shape = 'u8[4096]{0}', space=vmem, size = 0x1000, scoped, tag = 'input window, operand 0']
    #allocation3 [shape = 's32[2]{0}', space=sflag, size = 0x8, scoped, tag = 'scoped memory for tpu_custom_call.1']
    #allocation4 [shape = 's32[2]{0}', space=sflag, size = 0x8, scoped, tag = 'scoped memory for tpu_custom_call.1']
    #allocation5 [shape = 'u8[32768]{0}', space=vmem, size = 0x8000, scoped, tag = 'input window, operand 1, single buffered']
    #allocation6 [shape = 's32[1]{0}', space=sflag, size = 0x4, scoped, tag = 'scoped memory for tpu_custom_call.1']
    #allocation7 [shape = 'u8[32768]{0}', space=vmem, size = 0x8000, scoped, tag = 'input window, operand 4, single buffered']
    #allocation8 [shape = 'u8[32768]{0}', space=vmem, size = 0x8000, scoped, tag = 'input window, operand 7, single buffered']
    #allocation9 [shape = 's32[1]{0}', space=sflag, size = 0x4, scoped, tag = 'scoped memory for tpu_custom_call.1']
    #allocation10 [shape = 'u8[8192]{0}', space=vmem, size = 0x2000, scoped, tag = 'output window, operand 0']
    %14 = vsyncpa [#allocation3], 0
    %s15 = scalar_lea.sflag [#allocation3], 1
    %16 = vsyncpa %s15, 0
    %17 = vsyncpa [#allocation6], 0
    %18 = vsyncpa [#allocation9], 0
    %19 = vsyncpa [#allocation4], 0
    %s20 = scalar_lea.sflag [#allocation4], 1
    %21 = vsyncpa %s20, 0
    loop: start=0, step=1, limit=6
    $region2: #{tpu_custom_call.1} parent=1 // loop_pre_header
      _
    $region3: #{tpu_custom_call.1} parent=1 // loop_header
      %s23 = sphi 0, %s27
      %p24 = scmp.ge.s32.totalorder %s23, 6
      %s33 = sphi 0, %s35
      %s36 = sphi 0, %s33
      %s37 = sphi 0, %s36
      %s53 = sphi 0, %s37
      %s57 = sphi 0, %s57
      %s59 = sphi 0, %s57
      %s60 = sphi 0, %s59
      %s74 = sphi 0, %s60
      %s78 = sphi 0, %s78
      %s80 = sphi 0, %s78
      %s81 = sphi 0, %s80
      %s95 = sphi 0, %s81
      %s99 = sphi 0, %s99
      %s101 = sphi 0, %s99
      %s102 = sphi 0, %s101
      %s116 = sphi 0, %s102
      %s120 = sphi 0, %s120
      %s122 = sphi 0, %s120
      %s123 = sphi 0, %s122
      %s137 = sphi 0, %s123
      %s141 = sphi 0, %s141
      %s143 = sphi 0, %s141
      %s144 = sphi 0, %s143
      %s158 = sphi 0, %s144
      %s162 = sphi 0, %s162
      %s164 = sphi 0, %s162
      %s165 = sphi 0, %s164
      %s179 = sphi 0, %s165
      %s183 = sphi 0, %s183
      %s185 = sphi 0, %s183
      %s186 = sphi 0, %s185
      %s200 = sphi 0, %s186
      %s204 = sphi 0, %s204
      %s206 = sphi 0, %s204
      %s207 = sphi 0, %s206
      %s221 = sphi 0, %s207
      %s227 = sphi 0, %s229
      %s230 = sphi 0, %s227
      %s231 = sphi 0, %s230
      %s247 = sphi 0, %s231
    $region4: #{tpu_custom_call.1} parent=1 // loop_header_branch
      %26 = sbr.rel (%p24) target = $region8
    $region5: #{tpu_custom_call.1} parent=1 // loop_body
      %s28 = ssub.s32 %s23, 1
      %s29 = ssub.s32 %s23, 2
      %s30 = sadd.s32 %s23, 1
      %s31 = ssub.s32 %s23, %s30
      %p32 = scmp.eq.s32.totalorder %s31, 0
      %s34 = sadd.s32 %s33, 1
      %s35 = scalar_select %p32, %s33, %s34
      %p38 = pneg %p32
      %p39 = scmp.eq.s32.totalorder %s23, 3
      %p40 = por %p38, %p39
      %p41 = scmp.ne.s32.totalorder %s33, %s36
      %p42 = scmp.eq.s32.totalorder %s23, 0
      %p43 = por %p41, %p42
      %p44 = scmp.ne.s32.totalorder %s33, %s36
      %p45 = scmp.eq.s32.totalorder %s28, 3
      %p46 = por %p44, %p45
      %p47 = scmp.ne.s32.totalorder %s36, %s37
      %p48 = scmp.eq.s32.totalorder %s28, 0
      %p49 = por %p47, %p48
      %p50 = scmp.ne.s32.totalorder %s36, %s37
      %p51 = scmp.eq.s32.totalorder %s29, 3
      %p52 = por %p50, %p51
      %p54 = scmp.ne.s32.totalorder %s37, %s53
      %p55 = scmp.eq.s32.totalorder %s29, 0
      %p56 = por %p54, %p55
      %s58 = sadd.s32 %s57, 1
      %p61 = scmp.eq.s32.totalorder %s23, 3
      %p62 = scmp.ne.s32.totalorder %s57, %s59
      %p63 = scmp.eq.s32.totalorder %s23, 0
      %p64 = por %p62, %p63
      %p65 = scmp.ne.s32.totalorder %s57, %s59
      %p66 = scmp.eq.s32.totalorder %s28, 3
      %p67 = por %p65, %p66
      %p68 = scmp.ne.s32.totalorder %s59, %s60
      %p69 = scmp.eq.s32.totalorder %s28, 0
      %p70 = por %p68, %p69
      %p71 = scmp.ne.s32.totalorder %s59, %s60
      %p72 = scmp.eq.s32.totalorder %s29, 3
      %p73 = por %p71, %p72
      %p75 = scmp.ne.s32.totalorder %s60, %s74
      %p76 = scmp.eq.s32.totalorder %s29, 0
      %p77 = por %p75, %p76
      %s79 = sadd.s32 %s78, 1
      %p82 = scmp.eq.s32.totalorder %s23, 3
      %p83 = scmp.ne.s32.totalorder %s78, %s80
      %p84 = scmp.eq.s32.totalorder %s23, 0
      %p85 = por %p83, %p84
      %p86 = scmp.ne.s32.totalorder %s78, %s80
      %p87 = scmp.eq.s32.totalorder %s28, 3
      %p88 = por %p86, %p87
      %p89 = scmp.ne.s32.totalorder %s80, %s81
      %p90 = scmp.eq.s32.totalorder %s28, 0
      %p91 = por %p89, %p90
      %p92 = scmp.ne.s32.totalorder %s80, %s81
      %p93 = scmp.eq.s32.totalorder %s29, 3
      %p94 = por %p92, %p93
      %p96 = scmp.ne.s32.totalorder %s81, %s95
      %p97 = scmp.eq.s32.totalorder %s29, 0
      %p98 = por %p96, %p97
      %s100 = sadd.s32 %s99, 1
      %p103 = scmp.eq.s32.totalorder %s23, 3
      %p104 = scmp.ne.s32.totalorder %s99, %s101
      %p105 = scmp.eq.s32.totalorder %s23, 0
      %p106 = por %p104, %p105
      %p107 = scmp.ne.s32.totalorder %s99, %s101
      %p108 = scmp.eq.s32.totalorder %s28, 3
      %p109 = por %p107, %p108
      %p110 = scmp.ne.s32.totalorder %s101, %s102
      %p111 = scmp.eq.s32.totalorder %s28, 0
      %p112 = por %p110, %p111
      %p113 = scmp.ne.s32.totalorder %s101, %s102
      %p114 = scmp.eq.s32.totalorder %s29, 3
      %p115 = por %p113, %p114
      %p117 = scmp.ne.s32.totalorder %s102, %s116
      %p118 = scmp.eq.s32.totalorder %s29, 0
      %p119 = por %p117, %p118
      %s121 = sadd.s32 %s120, 1
      %p124 = scmp.eq.s32.totalorder %s23, 3
      %p125 = scmp.ne.s32.totalorder %s120, %s122
      %p126 = scmp.eq.s32.totalorder %s23, 0
      %p127 = por %p125, %p126
      %p128 = scmp.ne.s32.totalorder %s120, %s122
      %p129 = scmp.eq.s32.totalorder %s28, 3
      %p130 = por %p128, %p129
      %p131 = scmp.ne.s32.totalorder %s122, %s123
      %p132 = scmp.eq.s32.totalorder %s28, 0
      %p133 = por %p131, %p132
      %p134 = scmp.ne.s32.totalorder %s122, %s123
      %p135 = scmp.eq.s32.totalorder %s29, 3
      %p136 = por %p134, %p135
      %p138 = scmp.ne.s32.totalorder %s123, %s137
      %p139 = scmp.eq.s32.totalorder %s29, 0
      %p140 = por %p138, %p139
      %s142 = sadd.s32 %s141, 1
      %p145 = scmp.eq.s32.totalorder %s23, 3
      %p146 = scmp.ne.s32.totalorder %s141, %s143
      %p147 = scmp.eq.s32.totalorder %s23, 0
      %p148 = por %p146, %p147
      %p149 = scmp.ne.s32.totalorder %s141, %s143
      %p150 = scmp.eq.s32.totalorder %s28, 3
      %p151 = por %p149, %p150
      %p152 = scmp.ne.s32.totalorder %s143, %s144
      %p153 = scmp.eq.s32.totalorder %s28, 0
      %p154 = por %p152, %p153
      %p155 = scmp.ne.s32.totalorder %s143, %s144
      %p156 = scmp.eq.s32.totalorder %s29, 3
      %p157 = por %p155, %p156
      %p159 = scmp.ne.s32.totalorder %s144, %s158
      %p160 = scmp.eq.s32.totalorder %s29, 0
      %p161 = por %p159, %p160
      %s163 = sadd.s32 %s162, 1
      %p166 = scmp.eq.s32.totalorder %s23, 3
      %p167 = scmp.ne.s32.totalorder %s162, %s164
      %p168 = scmp.eq.s32.totalorder %s23, 0
      %p169 = por %p167, %p168
      %p170 = scmp.ne.s32.totalorder %s162, %s164
      %p171 = scmp.eq.s32.totalorder %s28, 3
      %p172 = por %p170, %p171
      %p173 = scmp.ne.s32.totalorder %s164, %s165
      %p174 = scmp.eq.s32.totalorder %s28, 0
      %p175 = por %p173, %p174
      %p176 = scmp.ne.s32.totalorder %s164, %s165
      %p177 = scmp.eq.s32.totalorder %s29, 3
      %p178 = por %p176, %p177
      %p180 = scmp.ne.s32.totalorder %s165, %s179
      %p181 = scmp.eq.s32.totalorder %s29, 0
      %p182 = por %p180, %p181
      %s184 = sadd.s32 %s183, 1
      %p187 = scmp.eq.s32.totalorder %s23, 3
      %p188 = scmp.ne.s32.totalorder %s183, %s185
      %p189 = scmp.eq.s32.totalorder %s23, 0
      %p190 = por %p188, %p189
      %p191 = scmp.ne.s32.totalorder %s183, %s185
      %p192 = scmp.eq.s32.totalorder %s28, 3
      %p193 = por %p191, %p192
      %p194 = scmp.ne.s32.totalorder %s185, %s186
      %p195 = scmp.eq.s32.totalorder %s28, 0
      %p196 = por %p194, %p195
      %p197 = scmp.ne.s32.totalorder %s185, %s186
      %p198 = scmp.eq.s32.totalorder %s29, 3
      %p199 = por %p197, %p198
      %p201 = scmp.ne.s32.totalorder %s186, %s200
      %p202 = scmp.eq.s32.totalorder %s29, 0
      %p203 = por %p201, %p202
      %s205 = sadd.s32 %s204, 1
      %p208 = scmp.eq.s32.totalorder %s23, 3
      %p209 = scmp.ne.s32.totalorder %s204, %s206
      %p210 = scmp.eq.s32.totalorder %s23, 0
      %p211 = por %p209, %p210
      %p212 = scmp.ne.s32.totalorder %s204, %s206
      %p213 = scmp.eq.s32.totalorder %s28, 3
      %p214 = por %p212, %p213
      %p215 = scmp.ne.s32.totalorder %s206, %s207
      %p216 = scmp.eq.s32.totalorder %s28, 0
      %p217 = por %p215, %p216
      %p218 = scmp.ne.s32.totalorder %s206, %s207
      %p219 = scmp.eq.s32.totalorder %s29, 3
      %p220 = por %p218, %p219
      %p222 = scmp.ne.s32.totalorder %s207, %s221
      %p223 = scmp.eq.s32.totalorder %s29, 0
      %p224 = por %p222, %p223
      %s225 = ssub.s32 %s23, %s30
      %p226 = scmp.eq.s32.totalorder %s225, 0
      %s228 = sadd.s32 %s227, 1
      %s229 = scalar_select %p226, %s227, %s228
      %p232 = pneg %p226
      %p233 = scmp.eq.s32.totalorder %s23, 3
      %p234 = por %p232, %p233
      %p235 = scmp.ne.s32.totalorder %s227, %s230
      %p236 = scmp.eq.s32.totalorder %s23, 0
      %p237 = por %p235, %p236
      %p238 = scmp.ne.s32.totalorder %s227, %s230
      %p239 = scmp.eq.s32.totalorder %s28, 3
      %p240 = por %p238, %p239
      %p241 = scmp.ne.s32.totalorder %s230, %s231
      %p242 = scmp.eq.s32.totalorder %s28, 0
      %p243 = por %p241, %p242
      %p244 = scmp.ne.s32.totalorder %s230, %s231
      %p245 = scmp.eq.s32.totalorder %s29, 3
      %p246 = por %p244, %p245
      %p248 = scmp.ne.s32.totalorder %s231, %s247
      %p249 = scmp.eq.s32.totalorder %s29, 0
      %p250 = por %p248, %p249
      %p251 = scmp.le.s32.totalorder 1, %s23
      %p252 = scmp.lt.s32.totalorder %s23, 5
      %p253 = pnand %p251, %p252
      %p254 = pneg %p253
      // Predicated region
      $region9: #{tpu_custom_call.1} parent=5 // pred_check
        _
      $region10: #{tpu_custom_call.1} parent=5 // pred_check_branch
        %256 = sbr.rel (%p253) target = $region12
      $region11: #{tpu_custom_call.1} parent=5 // pred_region
        %s257 = ssub.s32 %s23, 1
        // Predicated region
        $region13: #{tpu_custom_call.1} parent=11 // pred_check
          %p258 = pneg %p70
        $region14: #{tpu_custom_call.1} parent=11 // pred_check_branch
          %260 = sbr.rel (%p258) target = $region16
        $region15: #{tpu_custom_call.1} parent=11 // pred_region
          %s262 = ssub.s32 1024, 1024
          %263 = vsyncadd [#allocation6], %s262
          %s264 = sshll.u32 [#allocation5], 4
          %s265 = int_to_ptr.vmem [resolvable:$true] %s264
          %270 = dma.hbm_to_vmem [thread:$0]  %s1, 1024, %s265, [#allocation6], 64, 64, 4
        $region16: #{tpu_custom_call.1} parent=11 // pred_fallthru
          _
        // Predicated region
        $region17: #{tpu_custom_call.1} parent=11 // pred_check
          %p271 = pneg %p91
        $region18: #{tpu_custom_call.1} parent=11 // pred_check_branch
          %273 = sbr.rel (%p271) target = $region20
        $region19: #{tpu_custom_call.1} parent=11 // pred_region
          _
        $region20: #{tpu_custom_call.1} parent=11 // pred_fallthru
          _
        // Predicated region
        $region21: #{tpu_custom_call.1} parent=11 // pred_check
          %p274 = pneg %p112
        $region22: #{tpu_custom_call.1} parent=11 // pred_check_branch
          %276 = sbr.rel (%p274) target = $region24
        $region23: #{tpu_custom_call.1} parent=11 // pred_region
          _
        $region24: #{tpu_custom_call.1} parent=11 // pred_fallthru
          _
        // Predicated region
        $region25: #{tpu_custom_call.1} parent=11 // pred_check
          %p277 = pneg %p133
        $region26: #{tpu_custom_call.1} parent=11 // pred_check_branch
          %279 = sbr.rel (%p277) target = $region28
        $region27: #{tpu_custom_call.1} parent=11 // pred_region
          %s281 = ssub.s32 1024, 1024
          %282 = vsyncadd [#allocation6], %s281
          %s283 = sshll.u32 [#allocation7], 4
          %s284 = int_to_ptr.vmem [resolvable:$true] %s283
          %289 = dma.hbm_to_vmem [thread:$0]  %s4, 1024, %s284, [#allocation6], 64, 64, 4
        $region28: #{tpu_custom_call.1} parent=11 // pred_fallthru
          _
        // Predicated region
        $region29: #{tpu_custom_call.1} parent=11 // pred_check
          %p290 = pneg %p154
        $region30: #{tpu_custom_call.1} parent=11 // pred_check_branch
          %292 = sbr.rel (%p290) target = $region32
        $region31: #{tpu_custom_call.1} parent=11 // pred_region
          _
        $region32: #{tpu_custom_call.1} parent=11 // pred_fallthru
          _
        // Predicated region
        $region33: #{tpu_custom_call.1} parent=11 // pred_check
          %p293 = pneg %p175
        $region34: #{tpu_custom_call.1} parent=11 // pred_check_branch
          %295 = sbr.rel (%p293) target = $region36
        $region35: #{tpu_custom_call.1} parent=11 // pred_region
          _
        $region36: #{tpu_custom_call.1} parent=11 // pred_fallthru
          _
        // Predicated region
        $region37: #{tpu_custom_call.1} parent=11 // pred_check
          %p296 = pneg %p196
        $region38: #{tpu_custom_call.1} parent=11 // pred_check_branch
          %298 = sbr.rel (%p296) target = $region40
        $region39: #{tpu_custom_call.1} parent=11 // pred_region
          %s300 = ssub.s32 1024, 1024
          %301 = vsyncadd [#allocation9], %s300
          %s302 = sshll.u32 [#allocation8], 4
          %s303 = int_to_ptr.vmem [resolvable:$true] %s302
          %308 = dma.hbm_to_vmem [thread:$0]  %s7, 1024, %s303, [#allocation9], 64, 64, 4
        $region40: #{tpu_custom_call.1} parent=11 // pred_fallthru
          _
        // Predicated region
        $region41: #{tpu_custom_call.1} parent=11 // pred_check
          %p309 = pneg %p217
        $region42: #{tpu_custom_call.1} parent=11 // pred_check_branch
          %311 = sbr.rel (%p309) target = $region44
        $region43: #{tpu_custom_call.1} parent=11 // pred_region
          _
        $region44: #{tpu_custom_call.1} parent=11 // pred_fallthru
          _
      $region12: #{tpu_custom_call.1} parent=5 // pred_fallthru
        _
      %p312 = scmp.lt.s32.totalorder %s23, 4
      // Predicated region
      $region45: #{tpu_custom_call.1} parent=5 // pred_check
        %p313 = pneg %p312
      $region46: #{tpu_custom_call.1} parent=5 // pred_check_branch
        %315 = sbr.rel (%p313) target = $region48
      $region47: #{tpu_custom_call.1} parent=5 // pred_region
        // Predicated region
        $region49: #{tpu_custom_call.1} parent=47 // pred_check
          %p316 = pneg %p43
        $region50: #{tpu_custom_call.1} parent=47 // pred_check_branch
          %318 = sbr.rel (%p316) target = $region52
        $region51: #{tpu_custom_call.1} parent=47 // pred_region
          %s319 = sand.u32 %s33, 1
          %s320 = scalar_lea.sflag [#allocation3], %s319
          %s321 = sand.u32 %s33, 1
          %s322 = smul.addr %s321, 4
          %s323 = scalar_lea.vmem [#allocation2], %s322
          %s325 = ssub.s32 64, 64
          %326 = vsyncadd %s320, %s325
          %s327 = smul.addr %s23, 64
          %s328 = scalar_lea.hbm %s0, %s327
          %s330 = sshll.u32 %s323, 4
          %s331 = int_to_ptr.vmem [resolvable:$true] %s330
          %333 = dma.hbm_to_vmem [thread:$0]  %s328, 64, %s331, %s320
        $region52: #{tpu_custom_call.1} parent=47 // pred_fallthru
          _
      $region48: #{tpu_custom_call.1} parent=5 // pred_fallthru
        _
      %p334 = scmp.le.s32.totalorder 1, %s23
      %p335 = scmp.lt.s32.totalorder %s23, 5
      %p336 = pnand %p334, %p335
      %p337 = pneg %p336
      // Predicated region
      $region53: #{tpu_custom_call.1} parent=5 // pred_check
        _
      $region54: #{tpu_custom_call.1} parent=5 // pred_check_branch
        %339 = sbr.rel (%p336) target = $region56
      $region55: #{tpu_custom_call.1} parent=5 // pred_region
        %s340 = ssub.s32 %s23, 1
        %s341 = sand.u32 %s36, 1
        %s342 = scalar_lea.sflag [#allocation3], %s341
        %s343 = sand.u32 %s36, 1
        %s344 = smul.addr %s343, 4
        %s345 = scalar_lea.vmem [#allocation2], %s344
        // Predicated region
        $region57: #{tpu_custom_call.1} parent=55 // pred_check
          %p346 = pneg %p49
        $region58: #{tpu_custom_call.1} parent=55 // pred_check_branch
          %348 = sbr.rel (%p346) target = $region60
        $region59: #{tpu_custom_call.1} parent=55 // pred_region
          %349 = dma.done %s342, 64
        $region60: #{tpu_custom_call.1} parent=55 // pred_fallthru
          _
        // Predicated region
        $region61: #{tpu_custom_call.1} parent=55 // pred_check
          %p350 = pneg %p70
        $region62: #{tpu_custom_call.1} parent=55 // pred_check_branch
          %352 = sbr.rel (%p350) target = $region64
        $region63: #{tpu_custom_call.1} parent=55 // pred_region
          %353 = dma.done [#allocation6], 1024
        $region64: #{tpu_custom_call.1} parent=55 // pred_fallthru
          _
        // Predicated region
        $region65: #{tpu_custom_call.1} parent=55 // pred_check
          %p354 = pneg %p133
        $region66: #{tpu_custom_call.1} parent=55 // pred_check_branch
          %356 = sbr.rel (%p354) target = $region68
        $region67: #{tpu_custom_call.1} parent=55 // pred_region
          %357 = dma.done [#allocation6], 1024
        $region68: #{tpu_custom_call.1} parent=55 // pred_fallthru
          _
        // Predicated region
        $region69: #{tpu_custom_call.1} parent=55 // pred_check
          %p358 = pneg %p196
        $region70: #{tpu_custom_call.1} parent=55 // pred_check_branch
          %360 = sbr.rel (%p358) target = $region72
        $region71: #{tpu_custom_call.1} parent=55 // pred_region
          %361 = dma.done [#allocation9], 1024
        $region72: #{tpu_custom_call.1} parent=55 // pred_fallthru
          _
        %s362 = sand.u32 %s36, 1
        %s363 = scalar_lea.sflag [#allocation3], %s362
        %s364 = sand.u32 %s36, 1
        %s365 = smul.addr %s364, 4
        %s366 = scalar_lea.vmem [#allocation2], %s365
        %p367 = pneg %p49
        %p368 = pneg %p46
        %p369 = pneg %p70
        %p370 = pneg %p67
        %p371 = pneg %p91
        %p372 = pneg %p88
        %p373 = pneg %p112
        %p374 = pneg %p109
        %p375 = pneg %p133
        %p376 = pneg %p130
        %p377 = pneg %p154
        %p378 = pneg %p151
        %p379 = pneg %p175
        %p380 = pneg %p172
        %p381 = pneg %p196
        %p382 = pneg %p193
        %p383 = pneg %p217
        %p384 = pneg %p214
        %p385 = pneg %p243
        %p386 = pneg %p240
        %s387 = sand.u32 %s230, 1
        %s388 = scalar_lea.sflag [#allocation4], %s387
        %s389 = sand.u32 %s230, 1
        %s390 = smul.addr %s389, 8
        %s391 = scalar_lea.vmem [#allocation10], %s390
        %v393 = vld [vmem:[%s345] sm:$0xf]
        %v394 = vld [vmem:[#allocation5] sm:$0xf]
        %v395 = vld [vmem:[#allocation5 + $0x4] sm:$0xf]
        %v396 = vld [vmem:[#allocation5 + $0x8] sm:$0xf]
        %v397 = vld [vmem:[#allocation5 + $0xc] sm:$0xf]
        %v398 = vld [vmem:[#allocation5 + $0x10] sm:$0xf]
        %v399 = vld [vmem:[#allocation5 + $0x14] sm:$0xf]
        %v400 = vld [vmem:[#allocation5 + $0x18] sm:$0xf]
        %v401 = vld [vmem:[#allocation5 + $0x1c] sm:$0xf]
        %v402 = vld [vmem:[#allocation5 + $0x20] sm:$0xf]
        %v403 = vld [vmem:[#allocation5 + $0x24] sm:$0xf]
        %v404 = vld [vmem:[#allocation5 + $0x28] sm:$0xf]
        %v405 = vld [vmem:[#allocation5 + $0x2c] sm:$0xf]
        %v406 = vld [vmem:[#allocation5 + $0x30] sm:$0xf]
        %v407 = vld [vmem:[#allocation5 + $0x34] sm:$0xf]
        %v408 = vld [vmem:[#allocation5 + $0x38] sm:$0xf]
        %v409 = vld [vmem:[#allocation5 + $0x3c] sm:$0xf]
        %v426 = vunpack.c.l.b16 %v394
        %v427 = vunpack.c.l.b16 %v395
        %v428 = vunpack.c.l.b16 %v396
        %v429 = vunpack.c.l.b16 %v397
        %v430 = vunpack.c.l.b16 %v398
        %v431 = vunpack.c.l.b16 %v399
        %v432 = vunpack.c.l.b16 %v400
        %v433 = vunpack.c.l.b16 %v401
        %v434 = vunpack.c.l.b16 %v402
        %v435 = vunpack.c.l.b16 %v403
        %v436 = vunpack.c.l.b16 %v404
        %v437 = vunpack.c.l.b16 %v405
        %v438 = vunpack.c.l.b16 %v406
        %v439 = vunpack.c.l.b16 %v407
        %v440 = vunpack.c.l.b16 %v408
        %v441 = vunpack.c.l.b16 %v409
        %v442 = vpack.c.b16 %v427, %v426
        %v443 = vpack.c.b16 %v429, %v428
        %v444 = vpack.c.b16 %v431, %v430
        %v445 = vpack.c.b16 %v433, %v432
        %v446 = vpack.c.b16 %v435, %v434
        %v447 = vpack.c.b16 %v437, %v436
        %v448 = vpack.c.b16 %v439, %v438
        %v449 = vpack.c.b16 %v441, %v440
        %458 = vmatprep.subr.bf16.mxu0 0
        %459 = vmatpush1.bf16.msra.mxu0 %v449
        %460 = vmatprep.subr.bf16.mxu0 0
        %461 = vmatpush1.bf16.msra.mxu0 %v448
        %462 = vmatprep.subr.bf16.mxu0 0
        %463 = vmatpush1.bf16.msra.mxu0 %v447
        %464 = vmatprep.subr.bf16.mxu0 0
        %465 = vmatpush1.bf16.msra.mxu0 %v446
        %466 = vmatprep.subr.bf16.mxu0 0
        %467 = vmatpush1.bf16.msra.mxu0 %v445
        %468 = vmatprep.subr.bf16.mxu0 0
        %469 = vmatpush1.bf16.msra.mxu0 %v444
        %470 = vmatprep.subr.bf16.mxu0 0
        %471 = vmatpush1.bf16.msra.mxu0 %v443
        %472 = vmatprep.subr.bf16.mxu0 0
        %473 = vmatpush1.bf16.msra.mxu0 %v442
        %474 = vmatprep.subr.bf16.mxu0 0
        %475 = vmatpush2.bf16.msra.mxu0 0
        %476 = vmatprep.subr.bf16.mxu0 0
        %477 = vmatpush2.bf16.msra.mxu0 0
        %478 = vmatprep.subr.bf16.mxu0 0
        %479 = vmatpush2.bf16.msra.mxu0 0
        %480 = vmatprep.subr.bf16.mxu0 0
        %481 = vmatpush2.bf16.msra.mxu0 0
        %482 = vmatprep.subr.bf16.mxu0 0
        %483 = vmatpush2.bf16.msra.mxu0 0
        %484 = vmatprep.subr.bf16.mxu0 0
        %485 = vmatpush2.bf16.msra.mxu0 0
        %486 = vmatprep.subr.bf16.mxu0 0
        %487 = vmatpush2.bf16.msra.mxu0 0
        %488 = vmatprep.subr.bf16.mxu0 0
        %489 = vmatpush2.bf16.msra.mxu0 0
        %490 = vmatprep.mubr.bf16.mxu0 0
        %491 = vmatmul.mubr.bf16.gmra.mxu0 %v393
        %v492 = vpop.f32.mrf.mxu0
        %v493 = vadd.f32 0.0, %v492
        %v494 = vpop.f32.mrf.mxu0
        %v495 = vpop.f32.mrf.mxu0
        %v496 = vpop.f32.mrf.mxu0
        %497 = vdwg.mxu0
        %v498 = vld [vmem:[%s2] sm:$0x1]
        %v499 = vld [vmem:[%s3] sm:$0x1]
        %v500 = vrot.slane %v493, 4
        %v501 = vadd.f32 %v493, %v500
        %v502 = vrot.slane %v501, 2
        %v503 = vadd.f32 %v501, %v502
        %v504 = vrot.slane %v503, 1
        %v505 = vadd.f32 %v503, %v504
        %v506 = vrcp.pop 8.0
        %v507 = vmul.f32 %v505, %v506
        %v508 = vsub.f32 %v493, %v507
        %v509 = vmul.f32 %v508, %v508
        %v510 = vrot.slane %v509, 4
        %v511 = vadd.f32 %v509, %v510
        %v512 = vrot.slane %v511, 2
        %v513 = vadd.f32 %v511, %v512
        %v514 = vrot.slane %v513, 1
        %v515 = vadd.f32 %v513, %v514
        %v516 = vmul.f32 %v515, %v506
        %v517 = vadd.f32 %v516, 1e-05
        %v518 = vrsqrt.pop %v517
        %v519 = vmul.f32 %v518, %v498
        %v520 = vlaneseq
        %v521 = vshrl.u32 %v520, 7
        %v522 = vsub.s32 0, %v521
        %v523 = vrot.slane %v519, %v522
        %v524 = vmul.f32 %v508, %v523
        %v526 = vlaneseq
        %v527 = vshrl.u32 %v526, 7
        %v528 = vsub.s32 0, %v527
        %v529 = vrot.slane %v499, %v528
        %v531 = vadd.f32 %v524, %v529
        %v532 = vmax.f32 %v531, 0.0
        %v533 = vpack.c.bf16 %v532, %v532
        %v534 = vld [vmem:[#allocation7] sm:$0xf]
        %v535 = vld [vmem:[#allocation7 + $0x4] sm:$0xf]
        %v536 = vld [vmem:[#allocation7 + $0x8] sm:$0xf]
        %v537 = vld [vmem:[#allocation7 + $0xc] sm:$0xf]
        %v538 = vld [vmem:[#allocation7 + $0x10] sm:$0xf]
        %v539 = vld [vmem:[#allocation7 + $0x14] sm:$0xf]
        %v540 = vld [vmem:[#allocation7 + $0x18] sm:$0xf]
        %v541 = vld [vmem:[#allocation7 + $0x1c] sm:$0xf]
        %v542 = vld [vmem:[#allocation7 + $0x20] sm:$0xf]
        %v543 = vld [vmem:[#allocation7 + $0x24] sm:$0xf]
        %v544 = vld [vmem:[#allocation7 + $0x28] sm:$0xf]
        %v545 = vld [vmem:[#allocation7 + $0x2c] sm:$0xf]
        %v546 = vld [vmem:[#allocation7 + $0x30] sm:$0xf]
        %v547 = vld [vmem:[#allocation7 + $0x34] sm:$0xf]
        %v548 = vld [vmem:[#allocation7 + $0x38] sm:$0xf]
        %v549 = vld [vmem:[#allocation7 + $0x3c] sm:$0xf]
        %v566 = vunpack.c.l.b16 %v534
        %v567 = vunpack.c.l.b16 %v535
        %v568 = vunpack.c.l.b16 %v536
        %v569 = vunpack.c.l.b16 %v537
        %v570 = vunpack.c.l.b16 %v538
        %v571 = vunpack.c.l.b16 %v539
        %v572 = vunpack.c.l.b16 %v540
        %v573 = vunpack.c.l.b16 %v541
        %v574 = vunpack.c.l.b16 %v542
        %v575 = vunpack.c.l.b16 %v543
        %v576 = vunpack.c.l.b16 %v544
        %v577 = vunpack.c.l.b16 %v545
        %v578 = vunpack.c.l.b16 %v546
        %v579 = vunpack.c.l.b16 %v547
        %v580 = vunpack.c.l.b16 %v548
        %v581 = vunpack.c.l.b16 %v549
        %v582 = vpack.c.b16 %v567, %v566
        %v583 = vpack.c.b16 %v569, %v568
        %v584 = vpack.c.b16 %v571, %v570
        %v585 = vpack.c.b16 %v573, %v572
        %v586 = vpack.c.b16 %v575, %v574
        %v587 = vpack.c.b16 %v577, %v576
        %v588 = vpack.c.b16 %v579, %v578
        %v589 = vpack.c.b16 %v581, %v580
        %598 = vmatprep.subr.bf16.mxu0 0
        %599 = vmatpush1.bf16.msra.mxu0 %v589
        %600 = vmatprep.subr.bf16.mxu0 0
        %601 = vmatpush1.bf16.msra.mxu0 %v588
        %602 = vmatprep.subr.bf16.mxu0 0
        %603 = vmatpush1.bf16.msra.mxu0 %v587
        %604 = vmatprep.subr.bf16.mxu0 0
        %605 = vmatpush1.bf16.msra.mxu0 %v586
        %606 = vmatprep.subr.bf16.mxu0 0
        %607 = vmatpush1.bf16.msra.mxu0 %v585
        %608 = vmatprep.subr.bf16.mxu0 0
        %609 = vmatpush1.bf16.msra.mxu0 %v584
        %610 = vmatprep.subr.bf16.mxu0 0
        %611 = vmatpush1.bf16.msra.mxu0 %v583
        %612 = vmatprep.subr.bf16.mxu0 0
        %613 = vmatpush1.bf16.msra.mxu0 %v582
        %614 = vmatprep.subr.bf16.mxu0 0
        %615 = vmatpush2.bf16.msra.mxu0 0
        %616 = vmatprep.subr.bf16.mxu0 0
        %617 = vmatpush2.bf16.msra.mxu0 0
        %618 = vmatprep.subr.bf16.mxu0 0
        %619 = vmatpush2.bf16.msra.mxu0 0
        %620 = vmatprep.subr.bf16.mxu0 0
        %621 = vmatpush2.bf16.msra.mxu0 0
        %622 = vmatprep.subr.bf16.mxu0 0
        %623 = vmatpush2.bf16.msra.mxu0 0
        %624 = vmatprep.subr.bf16.mxu0 0
        %625 = vmatpush2.bf16.msra.mxu0 0
        %626 = vmatprep.subr.bf16.mxu0 0
        %627 = vmatpush2.bf16.msra.mxu0 0
        %628 = vmatprep.subr.bf16.mxu0 0
        %629 = vmatpush2.bf16.msra.mxu0 0
        %630 = vmatprep.mubr.bf16.mxu0 0
        %631 = vmatmul.mubr.bf16.gmra.mxu0 %v533
        %v632 = vpop.f32.mrf.mxu0
        %v633 = vadd.f32 0.0, %v632
        %v634 = vpop.f32.mrf.mxu0
        %v635 = vpop.f32.mrf.mxu0
        %v636 = vpop.f32.mrf.mxu0
        %637 = vdwg.mxu0
        %v638 = vld [vmem:[%s5] sm:$0x1]
        %v639 = vld [vmem:[%s6] sm:$0x1]
        %v640 = vrot.slane %v633, 4
        %v641 = vadd.f32 %v633, %v640
        %v642 = vrot.slane %v641, 2
        %v643 = vadd.f32 %v641, %v642
        %v644 = vrot.slane %v643, 1
        %v645 = vadd.f32 %v643, %v644
        %v646 = vmul.f32 %v645, %v506
        %v647 = vsub.f32 %v633, %v646
        %v648 = vmul.f32 %v647, %v647
        %v649 = vrot.slane %v648, 4
        %v650 = vadd.f32 %v648, %v649
        %v651 = vrot.slane %v650, 2
        %v652 = vadd.f32 %v650, %v651
        %v653 = vrot.slane %v652, 1
        %v654 = vadd.f32 %v652, %v653
        %v655 = vmul.f32 %v654, %v506
        %v656 = vadd.f32 %v655, 1e-05
        %v657 = vrsqrt.pop %v656
        %v658 = vmul.f32 %v657, %v638
        %v659 = vlaneseq
        %v660 = vshrl.u32 %v659, 7
        %v661 = vsub.s32 0, %v660
        %v662 = vrot.slane %v658, %v661
        %v663 = vmul.f32 %v647, %v662
        %v665 = vlaneseq
        %v666 = vshrl.u32 %v665, 7
        %v667 = vsub.s32 0, %v666
        %v668 = vrot.slane %v639, %v667
        %v670 = vadd.f32 %v663, %v668
        %v671 = vmax.f32 %v670, 0.0
        %v672 = vpack.c.bf16 %v671, %v671
        %v673 = vld [vmem:[#allocation8] sm:$0xf]
        %v674 = vld [vmem:[#allocation8 + $0x4] sm:$0xf]
        %v675 = vld [vmem:[#allocation8 + $0x8] sm:$0xf]
        %v676 = vld [vmem:[#allocation8 + $0xc] sm:$0xf]
        %v677 = vld [vmem:[#allocation8 + $0x10] sm:$0xf]
        %v678 = vld [vmem:[#allocation8 + $0x14] sm:$0xf]
        %v679 = vld [vmem:[#allocation8 + $0x18] sm:$0xf]
        %v680 = vld [vmem:[#allocation8 + $0x1c] sm:$0xf]
        %v681 = vld [vmem:[#allocation8 + $0x20] sm:$0xf]
        %v682 = vld [vmem:[#allocation8 + $0x24] sm:$0xf]
        %v683 = vld [vmem:[#allocation8 + $0x28] sm:$0xf]
        %v684 = vld [vmem:[#allocation8 + $0x2c] sm:$0xf]
        %v685 = vld [vmem:[#allocation8 + $0x30] sm:$0xf]
        %v686 = vld [vmem:[#allocation8 + $0x34] sm:$0xf]
        %v687 = vld [vmem:[#allocation8 + $0x38] sm:$0xf]
        %v688 = vld [vmem:[#allocation8 + $0x3c] sm:$0xf]
        %v689 = vld [vmem:[%s8] sm:$0x1]
        %v691 = vlaneseq
        %v692 = vshrl.u32 %v691, 7
        %v693 = vsub.s32 0, %v692
        %v694 = vrot.slane %v689, %v693
        %v712 = vunpack.c.l.b16 %v673
        %v713 = vunpack.c.l.b16 %v674
        %v714 = vunpack.c.l.b16 %v675
        %v715 = vunpack.c.l.b16 %v676
        %v716 = vunpack.c.l.b16 %v677
        %v717 = vunpack.c.l.b16 %v678
        %v718 = vunpack.c.l.b16 %v679
        %v719 = vunpack.c.l.b16 %v680
        %v720 = vunpack.c.l.b16 %v681
        %v721 = vunpack.c.l.b16 %v682
        %v722 = vunpack.c.l.b16 %v683
        %v723 = vunpack.c.l.b16 %v684
        %v724 = vunpack.c.l.b16 %v685
        %v725 = vunpack.c.l.b16 %v686
        %v726 = vunpack.c.l.b16 %v687
        %v727 = vunpack.c.l.b16 %v688
        %v728 = vpack.c.b16 %v713, %v712
        %v729 = vpack.c.b16 %v715, %v714
        %v730 = vpack.c.b16 %v717, %v716
        %v731 = vpack.c.b16 %v719, %v718
        %v732 = vpack.c.b16 %v721, %v720
        %v733 = vpack.c.b16 %v723, %v722
        %v734 = vpack.c.b16 %v725, %v724
        %v735 = vpack.c.b16 %v727, %v726
        %744 = vmatprep.subr.bf16.mxu0 0
        %745 = vmatpush1.bf16.msra.mxu0 %v735
        %746 = vmatprep.subr.bf16.mxu0 0
        %747 = vmatpush1.bf16.msra.mxu0 %v734
        %748 = vmatprep.subr.bf16.mxu0 0
        %749 = vmatpush1.bf16.msra.mxu0 %v733
        %750 = vmatprep.subr.bf16.mxu0 0
        %751 = vmatpush1.bf16.msra.mxu0 %v732
        %752 = vmatprep.subr.bf16.mxu0 0
        %753 = vmatpush1.bf16.msra.mxu0 %v731
        %754 = vmatprep.subr.bf16.mxu0 0
        %755 = vmatpush1.bf16.msra.mxu0 %v730
        %756 = vmatprep.subr.bf16.mxu0 0
        %757 = vmatpush1.bf16.msra.mxu0 %v729
        %758 = vmatprep.subr.bf16.mxu0 0
        %759 = vmatpush1.bf16.msra.mxu0 %v728
        %760 = vmatprep.subr.bf16.mxu0 0
        %761 = vmatpush2.bf16.msra.mxu0 0
        %762 = vmatprep.subr.bf16.mxu0 0
        %763 = vmatpush2.bf16.msra.mxu0 0
        %764 = vmatprep.subr.bf16.mxu0 0
        %765 = vmatpush2.bf16.msra.mxu0 0
        %766 = vmatprep.subr.bf16.mxu0 0
        %767 = vmatpush2.bf16.msra.mxu0 0
        %768 = vmatprep.subr.bf16.mxu0 0
        %769 = vmatpush2.bf16.msra.mxu0 0
        %770 = vmatprep.subr.bf16.mxu0 0
        %771 = vmatpush2.bf16.msra.mxu0 0
        %772 = vmatprep.subr.bf16.mxu0 0
        %773 = vmatpush2.bf16.msra.mxu0 0
        %774 = vmatprep.subr.bf16.mxu0 0
        %775 = vmatpush2.bf16.msra.mxu0 0
        %776 = vmatprep.mubr.bf16.mxu0 0
        %777 = vmatmul.mubr.bf16.gmra.mxu0 %v672
        %v778 = vpop.f32.mrf.mxu0
        %v779 = vadd.f32 %v694, %v778
        %v780 = vpop.f32.mrf.mxu0
        %v781 = vpop.f32.mrf.mxu0
        %v782 = vpop.f32.mrf.mxu0
        %783 = vdwg.mxu0
        %784 = vmax.xlane.f32.xlu0 %v779
        %v785 = vpop.xlane.xlu0 %784
        %v786 = vsub.f32 %v779, %v785
        %v787 = vmul.f32 %v786, 1.442695
        %v788 = vpow.pop %v787
        %789 = vadd.xlane.f32.xlu0 %v788
        %v790 = vpop.xlane.xlu0 %789
        %v791 = vlog2.pop %v790
        %v792 = vmul.f32 %v791, 0.6931472
        %v793 = vadd.f32 %v785, %v792
        %v794 = vsub.f32 %v779, %v793
        %795 = vst [vmem:[%s391] sm:$0xff] %v794
        %s796 = sand.u32 %s230, 1
        %s797 = scalar_lea.sflag [#allocation4], %s796
        %s798 = sand.u32 %s230, 1
        %s799 = smul.addr %s798, 8
        %s800 = scalar_lea.vmem [#allocation10], %s799
        // Predicated region
        $region73: #{tpu_custom_call.1} parent=55 // pred_check
          %p801 = pneg %p240
        $region74: #{tpu_custom_call.1} parent=55 // pred_check_branch
          %803 = sbr.rel (%p801) target = $region76
        $region75: #{tpu_custom_call.1} parent=55 // pred_region
          %s805 = ssub.s32 128, 128
          %806 = vsyncadd %s797, %s805
          %s807 = smul.addr %s28, 128
          %s808 = scalar_lea.hbm %s9, %s807
          %s810 = sshll.u32 %s800, 4
          %s811 = int_to_ptr.vmem [resolvable:$true] %s810
          %813 = dma.vmem_to_hbm [thread:$0]  %s811, 128, %s808, %s797
        $region76: #{tpu_custom_call.1} parent=55 // pred_fallthru
          _
      $region56: #{tpu_custom_call.1} parent=5 // pred_fallthru
        _
      %p814 = scmp.le.s32.totalorder 2, %s23
      // Predicated region
      $region77: #{tpu_custom_call.1} parent=5 // pred_check
        %p815 = pneg %p814
      $region78: #{tpu_custom_call.1} parent=5 // pred_check_branch
        %817 = sbr.rel (%p815) target = $region80
      $region79: #{tpu_custom_call.1} parent=5 // pred_region
        %s818 = ssub.s32 %s23, 2
        // Predicated region
        $region81: #{tpu_custom_call.1} parent=79 // pred_check
          %p819 = pneg %p246
        $region82: #{tpu_custom_call.1} parent=79 // pred_check_branch
          %821 = sbr.rel (%p819) target = $region84
        $region83: #{tpu_custom_call.1} parent=79 // pred_region
          %s822 = sand.u32 %s231, 1
          %s823 = scalar_lea.sflag [#allocation4], %s822
          %s824 = sand.u32 %s231, 1
          %s825 = smul.addr %s824, 8
          %s826 = scalar_lea.vmem [#allocation10], %s825
          %827 = dma.done %s823, 128
        $region84: #{tpu_custom_call.1} parent=79 // pred_fallthru
          _
      $region80: #{tpu_custom_call.1} parent=5 // pred_fallthru
        _
    $region6: #{tpu_custom_call.1} parent=1 // loop_footer
      %s27 = sadd.s32 1, %s23
    $region7: #{tpu_custom_call.1} parent=1 // loop_footer_branch
      %22 = sbr.rel target = $region3
    $region8: #{tpu_custom_call.1} parent=1 // loop_exit
      _
    %828 = vsyncpa [#allocation3], 1
    %s829 = scalar_lea.sflag [#allocation3], 1
    %830 = vsyncpa %s829, 1
    %831 = vsyncpa [#allocation6], 1
    %832 = vsyncpa [#allocation9], 1
    %833 = vsyncpa [#allocation4], 1
    %s834 = scalar_lea.sflag [#allocation4], 1
    %835 = vsyncpa %s834, 1

</llo_original>
